<compile_context>
chip_gen: v6e
topology: v6e:2x2x1
jax: 0.10.0
libtpu: 0.0.40
codegen_flags: <defaults>
</compile_context>

<pallas_src>
import functools
import math

import jax
import jax.numpy as jnp
from jax.experimental import pallas as pl
from jax.experimental.pallas import tpu as pltpu

_LOG2E = math.log2(math.e)


def _flash_attn_kernel(q_ref, k_ref, v_ref, o_ref, m_sc, l_sc, acc_sc,
                       *, kv_len, tk, mask_k):
    # q_ref: (Bt, tq, D), k_ref: (Bt, tk, D), v_ref: (Bt, tk, Dv)
    # o_ref: (Bt, tq, Dv)
    # scratch: m_sc (Bt, tq, 1), l_sc (Bt, tq, 1), acc_sc (Bt, tq, Dv) -- all f32
    kv = pl.program_id(2)

    @pl.when(kv == 0)
    def _():
        m_sc[...] = jnp.full_like(m_sc, -jnp.inf)
        l_sc[...] = jnp.zeros_like(l_sc)
        acc_sc[...] = jnp.zeros_like(acc_sc)

    d = q_ref.shape[-1]
    # Fold 1/sqrt(d) and log2(e) into Q (one (bt,tq,D) multiply) and cast the
    # MXU operands to bf16 (f32 accumulation via preferred_element_type).
    scale = _LOG2E / math.sqrt(d)
    q = (q_ref[...].astype(jnp.float32) * scale).astype(jnp.bfloat16)
    k = k_ref[...].astype(jnp.bfloat16)

    # scores * log2(e): contraction over D consumes K "transposed" directly on
    # the MXU (no explicit transpose / XLU work).
    s = jnp.einsum("bqd,bkd->bqk", q, k,
                   preferred_element_type=jnp.float32)      # (Bt, tq, tk) f32

    if mask_k:
        # Mask padded key columns (wrapper padded K up to a tile multiple).
        col = kv * tk + jax.lax.broadcasted_iota(jnp.int32, s.shape, 2)
        s = jnp.where(col < kv_len, s, -1e30)

    # Online (flash) softmax update, base 2.  All elementwise math stays f32.
    m_prev = m_sc[...]                                       # (Bt, tq, 1)
    m_new = jnp.maximum(m_prev, jnp.max(s, axis=-1, keepdims=True))
    alpha = jnp.exp2(m_prev - m_new)                         # rescale factor
    p = jnp.exp2(s - m_new)                                  # (Bt, tq, tk) f32

    l_sc[...] = alpha * l_sc[...] + jnp.sum(p, axis=-1, keepdims=True)
    acc_sc[...] = alpha * acc_sc[...] + jnp.einsum(
        "bqk,bkv->bqv", p.astype(jnp.bfloat16), v_ref[...].astype(jnp.bfloat16),
        preferred_element_type=jnp.float32)
    m_sc[...] = m_new

    @pl.when(kv == pl.num_programs(2) - 1)
    def _():
        inv_l = pl.reciprocal(l_sc[...], approx=True)        # EUP slot, ~free
        o_ref[...] = (acc_sc[...] * inv_l).astype(o_ref.dtype)


def _round_up(n, m):
    return ((n + m - 1) // m) * m


def _choose_tile(n, target, multiple):
    """Tile for an axis of length n: a multiple of `multiple`, <= max(target, multiple).

    Prefers an exact divisor of n (no padding); otherwise the caller pads n up
    to a multiple of the returned tile (never a full-extent fallback that could
    blow the VMEM budget on long axes)."""
    if n <= target:
        return _round_up(n, multiple)               # single (possibly padded) block
    t = max((target // multiple) * multiple, multiple)
    for cand in range(t, multiple - 1, -multiple):
        if n % cand == 0:
            return cand
    return t                                        # no nice divisor -> wrapper pads


def _choose_batch_block(b, tq, n_q_blocks):
    """Pack batch elements per grid step (amortize ~0.35us/step), but keep the
    parallel grid >= 2 steps whenever the problem allows (2 TCs on v7x)."""
    cap = max(1, 512 // max(tq, 1))
    min_parallel = 2 if b * n_q_blocks >= 2 else 1
    for bt in range(min(b, cap), 0, -1):
        if b % bt == 0 and (b // bt) * n_q_blocks >= min_parallel:
            return bt
    return 1


def _vmem_limit_bytes(bt, tq, tk, d, dv, itemsize):
    """Scoped-VMEM request from the real working set + headroom, clamped so we
    never ask for the entire physical VMEM of a v7x TensorCore (64 MiB)."""
    blocks = 2 * bt * (tq * d + tk * d + tk * dv + tq * dv) * itemsize  # 2-deep buffers
    scratch = bt * tq * (dv + 2) * 4
    scores = 3 * bt * tq * tk * 4                    # s / p / temporaries (f32)
    need = int((blocks + scratch + scores) * 1.5) + (8 << 20)
    return int(min(max(need, 16 << 20), 40 << 20))


def dot_product_attention(queries, keys, values, *, tq_target=512, tk_target=512):
    """queries: (B, Q, D), keys: (B, K, D), values: (B, K, Dv) -> (B, Q, Dv)."""
    B, Q, D = queries.shape
    Bk, K, Dk = keys.shape
    Bv, Kv, Dv = values.shape
    assert B == Bk == Bv and D == Dk and K == Kv

    # Dtype consistency: promote to a common dtype so no operand silently
    # downcasts; output dtype follows the promoted type.
    if not (queries.dtype == keys.dtype == values.dtype):
        dt = jnp.promote_types(jnp.promote_types(queries.dtype, keys.dtype),
                               values.dtype)
        queries, keys, values = (x.astype(dt) for x in (queries, keys, values))
    out_dtype = queries.dtype
    itemsize = jnp.dtype(out_dtype).itemsize

    q_mult = 16 if out_dtype == jnp.bfloat16 else 8
    k_mult = 128 if K >= 128 else 8                  # lane-dense score tiles

    tq = _choose_tile(Q, tq_target, q_mult)
    tk = _choose_tile(K, tk_target, k_mult)

    Q_pad = _round_up(Q, tq)
    K_pad = _round_up(K, tk)
    if Q_pad != Q:
        queries = jnp.pad(queries, ((0, 0), (0, Q_pad - Q), (0, 0)))
    if K_pad != K:
        keys = jnp.pad(keys, ((0, 0), (0, K_pad - K), (0, 0)))
        values = jnp.pad(values, ((0, 0), (0, K_pad - K), (0, 0)))

    n_q = Q_pad // tq
    n_k = K_pad // tk
    bt = _choose_batch_block(B, tq, n_q)
    grid = (B // bt, n_q, n_k)

    kernel = functools.partial(_flash_attn_kernel,
                               kv_len=K, tk=tk, mask_k=(K_pad != K))

    grid_spec = pltpu.PrefetchScalarGridSpec(
        num_scalar_prefetch=0,
        grid=grid,
        in_specs=[
            pl.BlockSpec((bt, tq, D), lambda b, qi, ki: (b, qi, 0)),
            pl.BlockSpec((bt, tk, D), lambda b, qi, ki: (b, ki, 0)),
            pl.BlockSpec((bt, tk, Dv), lambda b, qi, ki: (b, ki, 0)),
        ],
        out_specs=pl.BlockSpec((bt, tq, Dv), lambda b, qi, ki: (b, qi, 0)),
        scratch_shapes=[
            pltpu.VMEM((bt, tq, 1), jnp.float32),    # running max (log2 domain)
            pltpu.VMEM((bt, tq, 1), jnp.float32),    # running sum
            pltpu.VMEM((bt, tq, Dv), jnp.float32),   # f32 output accumulator
        ],
    )

    cost = pl.CostEstimate(
        flops=2 * B * Q_pad * K_pad * (D + Dv),
        transcendentals=B * Q_pad * K_pad,
        bytes_accessed=(B * Q_pad * D + B * K_pad * D + B * K_pad * Dv
                        + B * Q_pad * Dv) * itemsize,
    )

    out = pl.pallas_call(
        kernel,
        out_shape=jax.ShapeDtypeStruct((B, Q_pad, Dv), out_dtype),
        grid_spec=grid_spec,
        compiler_params=pltpu.CompilerParams(
            # batch & q-tile axes shard across TensorCores; the K axis carries
            # the resident accumulator so it must be "arbitrary".
            dimension_semantics=("parallel", "parallel", "arbitrary"),
            vmem_limit_bytes=_vmem_limit_bytes(bt, tq, tk, D, Dv, itemsize),
        ),
        cost_estimate=cost,
    )(queries, keys, values)

    if Q_pad != Q:
        out = out[:, :Q, :]
    return out


def _reference(queries, keys, values):
    d = queries.shape[-1]
    scores = jnp.einsum("bqd,bkd->bqk", queries, keys) / math.sqrt(d)
    w = jax.nn.softmax(scores, axis=-1)
    return jnp.einsum("bqk,bkv->bqv", w, values)


if __name__ == "__main__":
    key = jax.random.PRNGKey(0)

    # --- small shapes matching the module's toy usage ---------------------
    kq, kk, kv = jax.random.split(key, 3)
    B, Q, K, D, Dv = 2, 8, 8, 32, 32
    queries = jax.random.normal(kq, (B, Q, D), dtype=jnp.float32)
    keys = jax.random.normal(kk, (B, K, D), dtype=jnp.float32)
    values = jax.random.normal(kv, (B, K, Dv), dtype=jnp.float32)

    out = jax.block_until_ready(dot_product_attention(queries, keys, values))
    ref = _reference(queries, keys, values)
    assert out.shape == (B, Q, Dv)
    assert jnp.allclose(out, ref, atol=2e-2, rtol=2e-2), "small-shape mismatch"

    # --- larger shapes exercising the tiled / multi-K-block flash path ----
    k2q, k2k, k2v = jax.random.split(jax.random.PRNGKey(1), 3)
    B2, Q2, K2, D2, Dv2 = 2, 512, 1024, 64, 128
    q2 = jax.random.normal(k2q, (B2, Q2, D2), dtype=jnp.float32)
    kk2 = jax.random.normal(k2k, (B2, K2, D2), dtype=jnp.float32)
    v2 = jax.random.normal(k2v, (B2, K2, Dv2), dtype=jnp.float32)

    out2 = jax.block_until_ready(dot_product_attention(q2, kk2, v2))
    ref2 = _reference(q2, kk2, v2)
    assert out2.shape == (B2, Q2, Dv2)
    assert jnp.allclose(out2, ref2, atol=2e-2, rtol=2e-2), "tiled-path mismatch"

    # --- awkward (non-divisible) Q/K exercising the pad + mask path --------
    k3q, k3k, k3v = jax.random.split(jax.random.PRNGKey(2), 3)
    B3, Q3, K3, D3, Dv3 = 3, 24, 100, 32, 32
    q3 = jax.random.normal(k3q, (B3, Q3, D3), dtype=jnp.float32)
    kk3 = jax.random.normal(k3k, (B3, K3, D3), dtype=jnp.float32)
    v3 = jax.random.normal(k3v, (B3, K3, Dv3), dtype=jnp.float32)

    out3 = jax.block_until_ready(dot_product_attention(q3, kk3, v3))
    ref3 = _reference(q3, kk3, v3)
    assert out3.shape == (B3, Q3, Dv3)
    assert jnp.allclose(out3, ref3, atol=2e-2, rtol=2e-2), "padded-path mismatch"

    print("KERNEL_OK")
</pallas_src>

<mosaic_0001>
module attributes {stable_mosaic.version = 11 : i64} {
  func.func @_flash_attn_kernel(%arg0: i32, %arg1: i32, %arg2: i32, %arg3: memref<1x8x32xf32, #tpu.memory_space<vmem>>, %arg4: memref<1x8x32xf32, #tpu.memory_space<vmem>>, %arg5: memref<1x8x32xf32, #tpu.memory_space<vmem>>, %arg6: memref<1x8x32xf32, #tpu.memory_space<vmem>>, %arg7: memref<1x8x1xf32, #tpu.memory_space<vmem>>, %arg8: memref<1x8x1xf32, #tpu.memory_space<vmem>>, %arg9: memref<1x8x32xf32, #tpu.memory_space<vmem>>) attributes {dimension_semantics = [#tpu.dimension_semantics<parallel>, #tpu.dimension_semantics<parallel>, #tpu.dimension_semantics<arbitrary>], iteration_bounds = array<i64: 2, 1, 1>, scalar_prefetch = 0 : i64, scratch_operands = 3 : i64, tpu.core_type = #tpu.core_type<tc>, window_params = [{transform_indices = @transform_0, window_bounds = array<i64: 1, 8, 32>}, {transform_indices = @transform_1, window_bounds = array<i64: 1, 8, 32>}, {transform_indices = @transform_2, window_bounds = array<i64: 1, 8, 32>}, {transform_indices = @transform_3, window_bounds = array<i64: 1, 8, 32>}]} {
    %c0_i32 = arith.constant 0 : i32
    %0 = arith.cmpi eq, %arg2, %c0_i32 : i32
    %1 = arith.extui %0 : i1 to i32
    %c0_i32_0 = arith.constant 0 : i32
    %2 = arith.cmpi ne, %1, %c0_i32_0 : i32
    scf.if %2 {
      %cst_33 = arith.constant 0xFF800000 : f32
      %38 = vector.broadcast %cst_33 : f32 to vector<1x8x1xf32>
      %c0_34 = arith.constant 0 : index
      %c0_35 = arith.constant 0 : index
      %c0_36 = arith.constant 0 : index
      %39 = vector.load %arg7[%c0_34, %c0_35, %c0_36] : memref<1x8x1xf32, #tpu.memory_space<vmem>>, vector<1x8x1xf32>
      tpu.vector_store %arg7[%c0_34, %c0_35, %c0_36], %38 {strides = array<i32>} : memref<1x8x1xf32, #tpu.memory_space<vmem>>, vector<1x8x1xf32>,
      %cst_37 = arith.constant 0.000000e+00 : f32
      %40 = vector.broadcast %cst_37 : f32 to vector<1x8x1xf32>
      %c0_38 = arith.constant 0 : index
      %c0_39 = arith.constant 0 : index
      %c0_40 = arith.constant 0 : index
      %41 = vector.load %arg8[%c0_38, %c0_39, %c0_40] : memref<1x8x1xf32, #tpu.memory_space<vmem>>, vector<1x8x1xf32>
      tpu.vector_store %arg8[%c0_38, %c0_39, %c0_40], %40 {strides = array<i32>} : memref<1x8x1xf32, #tpu.memory_space<vmem>>, vector<1x8x1xf32>,
      %cst_41 = arith.constant 0.000000e+00 : f32
      %42 = vector.broadcast %cst_41 : f32 to vector<1x8x32xf32>
      %c0_42 = arith.constant 0 : index
      %c0_43 = arith.constant 0 : index
      %c0_44 = arith.constant 0 : index
      %43 = vector.load %arg9[%c0_42, %c0_43, %c0_44] : memref<1x8x32xf32, #tpu.memory_space<vmem>>, vector<1x8x32xf32>
      tpu.vector_store %arg9[%c0_42, %c0_43, %c0_44], %42 {strides = array<i32>} : memref<1x8x32xf32, #tpu.memory_space<vmem>>, vector<1x8x32xf32>,
    } else {
    }
    %c0 = arith.constant 0 : index
    %c0_1 = arith.constant 0 : index
    %c0_2 = arith.constant 0 : index
    %3 = vector.load %arg3[%c0, %c0_1, %c0_2] : memref<1x8x32xf32, #tpu.memory_space<vmem>>, vector<1x8x32xf32>
    %cst = arith.constant 0.255034864 : f32
    %4 = vector.broadcast %cst : f32 to vector<1x8x32xf32>
    %5 = arith.mulf %3, %4 : vector<1x8x32xf32>
    %6 = arith.truncf %5 : vector<1x8x32xf32> to vector<1x8x32xbf16>
    %c0_3 = arith.constant 0 : index
    %c0_4 = arith.constant 0 : index
    %c0_5 = arith.constant 0 : index
    %7 = vector.load %arg4[%c0_3, %c0_4, %c0_5] : memref<1x8x32xf32, #tpu.memory_space<vmem>>, vector<1x8x32xf32>
    %8 = arith.truncf %7 : vector<1x8x32xf32> to vector<1x8x32xbf16>
    "tpu.trace_start"() <{level = 10 : i32, message = "bqd,bkd->bqk"}> : () -> ()
    %cst_6 = arith.constant dense<0.000000e+00> : vector<1x8x8xf32>
    %9 = tpu.matmul %6, %8, %cst_6 {dimension_numbers = #tpu.dot_dimension_numbers<[2], [2], [1], [1], [0, 0, 0, 1, 1, 1], [0], [0]>} : vector<1x8x32xbf16>, vector<1x8x32xbf16>, vector<1x8x8xf32> -> vector<1x8x8xf32>
    "tpu.trace_stop"() : () -> ()
    %c0_7 = arith.constant 0 : index
    %c0_8 = arith.constant 0 : index
    %c0_9 = arith.constant 0 : index
    %10 = vector.load %arg7[%c0_7, %c0_8, %c0_9] : memref<1x8x1xf32, #tpu.memory_space<vmem>>, vector<1x8x1xf32>
    %cst_10 = arith.constant dense<0xFF800000> : vector<1x8xf32>
    %11 = vector.multi_reduction <maximumf>, %9, %cst_10 [2] : vector<1x8x8xf32> to vector<1x8xf32>
    %12 = vector.shape_cast %11 : vector<1x8xf32> to vector<1x8x1xf32>
    %13 = arith.maximumf %10, %12 : vector<1x8x1xf32>
    %14 = arith.subf %10, %13 : vector<1x8x1xf32>
    %15 = math.exp2 %14 : vector<1x8x1xf32>
    %16 = vector.broadcast %13 : vector<1x8x1xf32> to vector<1x8x8xf32>
    %17 = arith.subf %9, %16 : vector<1x8x8xf32>
    %18 = math.exp2 %17 : vector<1x8x8xf32>
    %c0_11 = arith.constant 0 : index
    %c0_12 = arith.constant 0 : index
    %c0_13 = arith.constant 0 : index
    %19 = vector.load %arg8[%c0_11, %c0_12, %c0_13] : memref<1x8x1xf32, #tpu.memory_space<vmem>>, vector<1x8x1xf32>
    %20 = arith.mulf %15, %19 : vector<1x8x1xf32>
    %cst_14 = arith.constant dense<0.000000e+00> : vector<1x8xf32>
    %21 = vector.multi_reduction <add>, %18, %cst_14 [2] : vector<1x8x8xf32> to vector<1x8xf32>
    %22 = vector.shape_cast %21 : vector<1x8xf32> to vector<1x8x1xf32>
    %23 = arith.addf %20, %22 : vector<1x8x1xf32>
    %c0_15 = arith.constant 0 : index
    %c0_16 = arith.constant 0 : index
    %c0_17 = arith.constant 0 : index
    %24 = vector.load %arg8[%c0_15, %c0_16, %c0_17] : memref<1x8x1xf32, #tpu.memory_space<vmem>>, vector<1x8x1xf32>
    tpu.vector_store %arg8[%c0_15, %c0_16, %c0_17], %23 {strides = array<i32>} : memref<1x8x1xf32, #tpu.memory_space<vmem>>, vector<1x8x1xf32>,
    %c0_18 = arith.constant 0 : index
    %c0_19 = arith.constant 0 : index
    %c0_20 = arith.constant 0 : index
    %25 = vector.load %arg9[%c0_18, %c0_19, %c0_20] : memref<1x8x32xf32, #tpu.memory_space<vmem>>, vector<1x8x32xf32>
    %26 = vector.broadcast %15 : vector<1x8x1xf32> to vector<1x8x32xf32>
    %27 = arith.mulf %26, %25 : vector<1x8x32xf32>
    %28 = arith.truncf %18 : vector<1x8x8xf32> to vector<1x8x8xbf16>
    %c0_21 = arith.constant 0 : index
    %c0_22 = arith.constant 0 : index
    %c0_23 = arith.constant 0 : index
    %29 = vector.load %arg5[%c0_21, %c0_22, %c0_23] : memref<1x8x32xf32, #tpu.memory_space<vmem>>, vector<1x8x32xf32>
    %30 = arith.truncf %29 : vector<1x8x32xf32> to vector<1x8x32xbf16>
    "tpu.trace_start"() <{level = 10 : i32, message = "bqk,bkv->bqv"}> : () -> ()
    %cst_24 = arith.constant dense<0.000000e+00> : vector<1x8x32xf32>
    %31 = tpu.matmul %28, %30, %cst_24 {dimension_numbers = #tpu.dot_dimension_numbers<[2], [1], [1], [2], [0, 0, 0, 1, 1, 2], [0], [0]>} : vector<1x8x8xbf16>, vector<1x8x32xbf16>, vector<1x8x32xf32> -> vector<1x8x32xf32>
    "tpu.trace_stop"() : () -> ()
    %32 = arith.addf %27, %31 : vector<1x8x32xf32>
    %c0_25 = arith.constant 0 : index
    %c0_26 = arith.constant 0 : index
    %c0_27 = arith.constant 0 : index
    %33 = vector.load %arg9[%c0_25, %c0_26, %c0_27] : memref<1x8x32xf32, #tpu.memory_space<vmem>>, vector<1x8x32xf32>
    tpu.vector_store %arg9[%c0_25, %c0_26, %c0_27], %32 {strides = array<i32>} : memref<1x8x32xf32, #tpu.memory_space<vmem>>, vector<1x8x32xf32>,
    %c0_28 = arith.constant 0 : index
    %c0_29 = arith.constant 0 : index
    %c0_30 = arith.constant 0 : index
    %34 = vector.load %arg7[%c0_28, %c0_29, %c0_30] : memref<1x8x1xf32, #tpu.memory_space<vmem>>, vector<1x8x1xf32>
    tpu.vector_store %arg7[%c0_28, %c0_29, %c0_30], %13 {strides = array<i32>} : memref<1x8x1xf32, #tpu.memory_space<vmem>>, vector<1x8x1xf32>,
    %c0_i32_31 = arith.constant 0 : i32
    %35 = arith.cmpi eq, %arg2, %c0_i32_31 : i32
    %36 = arith.extui %35 : i1 to i32
    %c0_i32_32 = arith.constant 0 : i32
    %37 = arith.cmpi ne, %36, %c0_i32_32 : i32
    scf.if %37 {
      %c0_33 = arith.constant 0 : index
      %c0_34 = arith.constant 0 : index
      %c0_35 = arith.constant 0 : index
      %38 = vector.load %arg8[%c0_33, %c0_34, %c0_35] : memref<1x8x1xf32, #tpu.memory_space<vmem>>, vector<1x8x1xf32>
      %39 = tpu.reciprocal %38 {approx = true} : vector<1x8x1xf32> -> vector<1x8x1xf32>
      %c0_36 = arith.constant 0 : index
      %c0_37 = arith.constant 0 : index
      %c0_38 = arith.constant 0 : index
      %40 = vector.load %arg9[%c0_36, %c0_37, %c0_38] : memref<1x8x32xf32, #tpu.memory_space<vmem>>, vector<1x8x32xf32>
      %41 = vector.broadcast %39 : vector<1x8x1xf32> to vector<1x8x32xf32>
      %42 = arith.mulf %40, %41 : vector<1x8x32xf32>
      %c0_39 = arith.constant 0 : index
      %c0_40 = arith.constant 0 : index
      %c0_41 = arith.constant 0 : index
      %43 = vector.load %arg6[%c0_39, %c0_40, %c0_41] : memref<1x8x32xf32, #tpu.memory_space<vmem>>, vector<1x8x32xf32>
      tpu.vector_store %arg6[%c0_39, %c0_40, %c0_41], %42 {strides = array<i32>} : memref<1x8x32xf32, #tpu.memory_space<vmem>>, vector<1x8x32xf32>,
    } else {
    }
    return
  }
  func.func @transform_0(%arg0: i32, %arg1: i32, %arg2: i32) -> (i32, i32, i32) {
    %c0_i32 = arith.constant 0 : i32
    %c0_i32_0 = arith.constant 0 : i32
    return %arg0, %arg1, %c0_i32 : i32, i32, i32
  }
  func.func @transform_1(%arg0: i32, %arg1: i32, %arg2: i32) -> (i32, i32, i32) {
    %c0_i32 = arith.constant 0 : i32
    %c0_i32_0 = arith.constant 0 : i32
    return %arg0, %arg2, %c0_i32 : i32, i32, i32
  }
  func.func @transform_2(%arg0: i32, %arg1: i32, %arg2: i32) -> (i32, i32, i32) {
    %c0_i32 = arith.constant 0 : i32
    %c0_i32_0 = arith.constant 0 : i32
    return %arg0, %arg2, %c0_i32 : i32, i32, i32
  }
  func.func @transform_3(%arg0: i32, %arg1: i32, %arg2: i32) -> (i32, i32, i32) {
    %c0_i32 = arith.constant 0 : i32
    %c0_i32_0 = arith.constant 0 : i32
    return %arg0, %arg1, %c0_i32 : i32, i32, i32
  }
}

</mosaic_0001>

<llo_original>
// kernel: tpu_custom_call.1
$region0: #{tpu_custom_call.1}
  #allocation0 [shape = 'u32[]', space=smem, size = 0x4, offset = 0x4, fixed_abs, tag = 'smem constant byte address 0x4 - core index']
  #allocation1 [shape = 'u32[144,128]{1,0:T(1,128)}', space=vmem, size = 0x12000, scoped, tag = 'internal scratch']
  #allocation2 [shape = 'f32[1,8,1]{2,1,0:T(8,128)}', space=vmem, size = 0x1000, scoped, tag = 'scratch operand']
  #allocation3 [shape = 'f32[1,8,1]{2,1,0:T(8,128)}', space=vmem, size = 0x1000, scoped, tag = 'scratch operand']
  #allocation4 [shape = 'f32[1,8,32]{2,1,0:T(8,128)}', space=vmem, size = 0x1000, scoped, tag = 'scratch operand']
  %s0 = inlined_call_operand.hbm [shape: f32[2,8,32], index: 0, kind: input, shape index: {}]
  %s1 = inlined_call_operand.hbm [shape: f32[2,8,32], index: 1, kind: input, shape index: {}]
  %s2 = inlined_call_operand.hbm [shape: f32[2,8,32], index: 2, kind: input, shape index: {}]
  %s3 = inlined_call_operand.hbm [shape: f32[2,8,32], index: 3, kind: output, shape index: {}]
  %s4 = sld [smem:[#allocation0]]
  $region65: #{tpu_custom_call.1} parent=0
    _
  %s6 = ssub.s32 1, %s4
  %s7 = scalar_select 0, %s6, %s4
  $region1: #{tpu_custom_call.1} parent=0
    #allocation5 [shape = 'u8[8192]{0}', space=vmem, size = 0x2000, scoped, tag = 'input window, operand 0']
    #allocation6 [shape = 's32[2]{0}', space=sflag, size = 0x8, scoped, tag = 'scoped memory for tpu_custom_call.1']
    #allocation7 [shape = 's32[2]{0}', space=sflag, size = 0x8, scoped, tag = 'scoped memory for tpu_custom_call.1']
    #allocation8 [shape = 'u8[8192]{0}', space=vmem, size = 0x2000, scoped, tag = 'input window, operand 1']
    #allocation9 [shape = 's32[2]{0}', space=sflag, size = 0x8, scoped, tag = 'scoped memory for tpu_custom_call.1']
    #allocation10 [shape = 'u8[8192]{0}', space=vmem, size = 0x2000, scoped, tag = 'input window, operand 2']
    #allocation11 [shape = 'u8[8192]{0}', space=vmem, size = 0x2000, scoped, tag = 'output window, operand 0']
    %8 = vsyncpa [#allocation6], 0
    %s9 = scalar_lea.sflag [#allocation6], 1
    %10 = vsyncpa %s9, 0
    %11 = vsyncpa [#allocation9], 0
    %s12 = scalar_lea.sflag [#allocation9], 1
    %13 = vsyncpa %s12, 0
    %14 = vsyncpa [#allocation7], 0
    %s15 = scalar_lea.sflag [#allocation7], 1
    %16 = vsyncpa %s15, 0
    loop: start=0, step=1, limit=4
    $region2: #{tpu_custom_call.1} parent=1 // loop_pre_header
      _
    $region3: #{tpu_custom_call.1} parent=1 // loop_header
      %s18 = sphi 0, %s22
      %p19 = scmp.ge.s32.totalorder %s18, 4
      %s25 = sphi 0, %s44
      %s26 = sphi 0, %s40
      %s27 = sphi 0, %s36
      %s28 = sphi 0, %s25
      %s29 = sphi 0, %s26
      %s30 = sphi 0, %s27
      %s31 = sphi 0, %s28
      %s32 = sphi 0, %s29
      %s33 = sphi 0, %s30
      %s49 = sphi 0, %s51
      %s52 = sphi 0, %s49
      %s53 = sphi 0, %s52
      %s69 = sphi 0, %s53
      %s77 = sphi 0, %s79
      %s80 = sphi 0, %s77
      %s81 = sphi 0, %s80
      %s97 = sphi 0, %s81
      %s105 = sphi 0, %s107
      %s108 = sphi 0, %s105
      %s109 = sphi 0, %s108
      %s125 = sphi 0, %s109
      %s133 = sphi 0, %s135
      %s136 = sphi 0, %s133
      %s137 = sphi 0, %s136
      %s153 = sphi 0, %s137
    $region4: #{tpu_custom_call.1} parent=1 // loop_header_branch
      %21 = sbr.rel (%p19) target = $region8
    $region5: #{tpu_custom_call.1} parent=1 // loop_body
      %s23 = ssub.s32 %s18, 1
      %s24 = ssub.s32 %s18, 2
      %s34 = sadd.s32 1, %s27
      %p35 = scmp.ge.s32.totalorder %s34, 1
      %s36 = scalar_select %p35, 0, %s34
      %s37 = sadd.s32 1, %s26
      %s38 = scalar_select %p35, %s37, %s26
      %p39 = scmp.ge.s32.totalorder %s38, 1
      %s40 = scalar_select %p39, 0, %s38
      %s41 = sadd.s32 1, %s25
      %s42 = scalar_select %p39, %s41, %s25
      %p43 = scmp.ge.s32.totalorder %s42, 2
      %s44 = scalar_select %p43, 0, %s42
      %s45 = ssub.s32 %s25, %s44
      %s46 = ssub.s32 %s26, %s40
      %s47 = sor.u32 %s45, %s46
      %p48 = scmp.eq.s32.totalorder %s47, 0
      %s50 = sadd.s32 %s49, 1
      %s51 = scalar_select %p48, %s49, %s50
      %p54 = pneg %p48
      %p55 = scmp.eq.s32.totalorder %s18, 1
      %p56 = por %p54, %p55
      %p57 = scmp.ne.s32.totalorder %s49, %s52
      %p58 = scmp.eq.s32.totalorder %s18, 0
      %p59 = por %p57, %p58
      %p60 = scmp.ne.s32.totalorder %s49, %s52
      %p61 = scmp.eq.s32.totalorder %s23, 1
      %p62 = por %p60, %p61
      %p63 = scmp.ne.s32.totalorder %s52, %s53
      %p64 = scmp.eq.s32.totalorder %s23, 0
      %p65 = por %p63, %p64
      %p66 = scmp.ne.s32.totalorder %s52, %s53
      %p67 = scmp.eq.s32.totalorder %s24, 1
      %p68 = por %p66, %p67
      %p70 = scmp.ne.s32.totalorder %s53, %s69
      %p71 = scmp.eq.s32.totalorder %s24, 0
      %p72 = por %p70, %p71
      %s73 = ssub.s32 %s25, %s44
      %s74 = ssub.s32 %s27, %s36
      %s75 = sor.u32 %s73, %s74
      %p76 = scmp.eq.s32.totalorder %s75, 0
      %s78 = sadd.s32 %s77, 1
      %s79 = scalar_select %p76, %s77, %s78
      %p82 = pneg %p76
      %p83 = scmp.eq.s32.totalorder %s18, 1
      %p84 = por %p82, %p83
      %p85 = scmp.ne.s32.totalorder %s77, %s80
      %p86 = scmp.eq.s32.totalorder %s18, 0
      %p87 = por %p85, %p86
      %p88 = scmp.ne.s32.totalorder %s77, %s80
      %p89 = scmp.eq.s32.totalorder %s23, 1
      %p90 = por %p88, %p89
      %p91 = scmp.ne.s32.totalorder %s80, %s81
      %p92 = scmp.eq.s32.totalorder %s23, 0
      %p93 = por %p91, %p92
      %p94 = scmp.ne.s32.totalorder %s80, %s81
      %p95 = scmp.eq.s32.totalorder %s24, 1
      %p96 = por %p94, %p95
      %p98 = scmp.ne.s32.totalorder %s81, %s97
      %p99 = scmp.eq.s32.totalorder %s24, 0
      %p100 = por %p98, %p99
      %s101 = ssub.s32 %s25, %s44
      %s102 = ssub.s32 %s27, %s36
      %s103 = sor.u32 %s101, %s102
      %p104 = scmp.eq.s32.totalorder %s103, 0
      %s106 = sadd.s32 %s105, 1
      %s107 = scalar_select %p104, %s105, %s106
      %p110 = pneg %p104
      %p111 = scmp.eq.s32.totalorder %s18, 1
      %p112 = por %p110, %p111
      %p113 = scmp.ne.s32.totalorder %s105, %s108
      %p114 = scmp.eq.s32.totalorder %s18, 0
      %p115 = por %p113, %p114
      %p116 = scmp.ne.s32.totalorder %s105, %s108
      %p117 = scmp.eq.s32.totalorder %s23, 1
      %p118 = por %p116, %p117
      %p119 = scmp.ne.s32.totalorder %s108, %s109
      %p120 = scmp.eq.s32.totalorder %s23, 0
      %p121 = por %p119, %p120
      %p122 = scmp.ne.s32.totalorder %s108, %s109
      %p123 = scmp.eq.s32.totalorder %s24, 1
      %p124 = por %p122, %p123
      %p126 = scmp.ne.s32.totalorder %s109, %s125
      %p127 = scmp.eq.s32.totalorder %s24, 0
      %p128 = por %p126, %p127
      %s129 = ssub.s32 %s25, %s44
      %s130 = ssub.s32 %s26, %s40
      %s131 = sor.u32 %s129, %s130
      %p132 = scmp.eq.s32.totalorder %s131, 0
      %s134 = sadd.s32 %s133, 1
      %s135 = scalar_select %p132, %s133, %s134
      %p138 = pneg %p132
      %p139 = scmp.eq.s32.totalorder %s18, 1
      %p140 = por %p138, %p139
      %p141 = scmp.ne.s32.totalorder %s133, %s136
      %p142 = scmp.eq.s32.totalorder %s18, 0
      %p143 = por %p141, %p142
      %p144 = scmp.ne.s32.totalorder %s133, %s136
      %p145 = scmp.eq.s32.totalorder %s23, 1
      %p146 = por %p144, %p145
      %p147 = scmp.ne.s32.totalorder %s136, %s137
      %p148 = scmp.eq.s32.totalorder %s23, 0
      %p149 = por %p147, %p148
      %p150 = scmp.ne.s32.totalorder %s136, %s137
      %p151 = scmp.eq.s32.totalorder %s24, 1
      %p152 = por %p150, %p151
      %p154 = scmp.ne.s32.totalorder %s137, %s153
      %p155 = scmp.eq.s32.totalorder %s24, 0
      %p156 = por %p154, %p155
      %p157 = scmp.le.s32.totalorder 1, %s18
      %p158 = scmp.lt.s32.totalorder %s18, 3
      %p159 = pnand %p157, %p158
      %p160 = pneg %p159
      // Predicated region
      $region9: #{tpu_custom_call.1} parent=5 // pred_check
        _
      $region10: #{tpu_custom_call.1} parent=5 // pred_check_branch
        %162 = sbr.rel (%p159) target = $region12
      $region11: #{tpu_custom_call.1} parent=5 // pred_region
        %s163 = ssub.s32 %s18, 1
      $region12: #{tpu_custom_call.1} parent=5 // pred_fallthru
        _
      %p164 = scmp.lt.s32.totalorder %s18, 2
      // Predicated region
      $region13: #{tpu_custom_call.1} parent=5 // pred_check
        %p165 = pneg %p164
      $region14: #{tpu_custom_call.1} parent=5 // pred_check_branch
        %167 = sbr.rel (%p165) target = $region16
      $region15: #{tpu_custom_call.1} parent=5 // pred_region
        // Predicated region
        $region17: #{tpu_custom_call.1} parent=15 // pred_check
          %p168 = pneg %p59
        $region18: #{tpu_custom_call.1} parent=15 // pred_check_branch
          %170 = sbr.rel (%p168) target = $region20
        $region19: #{tpu_custom_call.1} parent=15 // pred_region
          %s171 = sand.u32 %s49, 1
          %s172 = scalar_lea.sflag [#allocation6], %s171
          %s173 = sand.u32 %s49, 1
          %s174 = smul.addr %s173, 8
          %s175 = scalar_lea.vmem [#allocation5], %s174
          %s177 = ssub.s32 128, 128
          %178 = vsyncadd %s172, %s177
          %s179 = sadd.s32 %s26, %s25
          %s180 = smul.addr %s179, 128
          %s181 = scalar_lea.hbm %s0, %s180
          %s183 = sshll.u32 %s175, 4
          %s184 = int_to_ptr.vmem [resolvable:$true] %s183
          %186 = dma.hbm_to_vmem [thread:$0]  %s181, 128, %s184, %s172
        $region20: #{tpu_custom_call.1} parent=15 // pred_fallthru
          _
        // Predicated region
        $region21: #{tpu_custom_call.1} parent=15 // pred_check
          %p187 = pneg %p87
        $region22: #{tpu_custom_call.1} parent=15 // pred_check_branch
          %189 = sbr.rel (%p187) target = $region24
        $region23: #{tpu_custom_call.1} parent=15 // pred_region
          %s190 = sand.u32 %s18, 1
          %s191 = scalar_lea.sflag [#allocation9], %s190
          %s192 = sand.u32 %s77, 1
          %s193 = smul.addr %s192, 8
          %s194 = scalar_lea.vmem [#allocation8], %s193
          %s196 = ssub.s32 128, 128
          %197 = vsyncadd %s191, %s196
          %s198 = sadd.s32 %s27, %s25
          %s199 = smul.addr %s198, 128
          %s200 = scalar_lea.hbm %s1, %s199
          %s202 = sshll.u32 %s194, 4
          %s203 = int_to_ptr.vmem [resolvable:$true] %s202
          %205 = dma.hbm_to_vmem [thread:$0]  %s200, 128, %s203, %s191
        $region24: #{tpu_custom_call.1} parent=15 // pred_fallthru
          _
        // Predicated region
        $region25: #{tpu_custom_call.1} parent=15 // pred_check
          %p206 = pneg %p115
        $region26: #{tpu_custom_call.1} parent=15 // pred_check_branch
          %208 = sbr.rel (%p206) target = $region28
        $region27: #{tpu_custom_call.1} parent=15 // pred_region
          %s209 = sand.u32 %s18, 1
          %s210 = scalar_lea.sflag [#allocation9], %s209
          %s211 = sand.u32 %s105, 1
          %s212 = smul.addr %s211, 8
          %s213 = scalar_lea.vmem [#allocation10], %s212
          %s215 = ssub.s32 128, 128
          %216 = vsyncadd %s210, %s215
          %s217 = sadd.s32 %s27, %s25
          %s218 = smul.addr %s217, 128
          %s219 = scalar_lea.hbm %s2, %s218
          %s221 = sshll.u32 %s213, 4
          %s222 = int_to_ptr.vmem [resolvable:$true] %s221
          %224 = dma.hbm_to_vmem [thread:$0]  %s219, 128, %s222, %s210
        $region28: #{tpu_custom_call.1} parent=15 // pred_fallthru
          _
      $region16: #{tpu_custom_call.1} parent=5 // pred_fallthru
        _
      %p225 = scmp.le.s32.totalorder 1, %s18
      %p226 = scmp.lt.s32.totalorder %s18, 3
      %p227 = pnand %p225, %p226
      %p228 = pneg %p227
      // Predicated region
      $region29: #{tpu_custom_call.1} parent=5 // pred_check
        _
      $region30: #{tpu_custom_call.1} parent=5 // pred_check_branch
        %230 = sbr.rel (%p227) target = $region32
      $region31: #{tpu_custom_call.1} parent=5 // pred_region
        %s231 = ssub.s32 %s18, 1
        %s232 = sand.u32 %s52, 1
        %s233 = scalar_lea.sflag [#allocation6], %s232
        %s234 = sand.u32 %s52, 1
        %s235 = smul.addr %s234, 8
        %s236 = scalar_lea.vmem [#allocation5], %s235
        // Predicated region
        $region33: #{tpu_custom_call.1} parent=31 // pred_check
          %p237 = pneg %p65
        $region34: #{tpu_custom_call.1} parent=31 // pred_check_branch
          %239 = sbr.rel (%p237) target = $region36
        $region35: #{tpu_custom_call.1} parent=31 // pred_region
          %240 = dma.done %s233, 128
        $region36: #{tpu_custom_call.1} parent=31 // pred_fallthru
          _
        %s241 = sand.u32 %s23, 1
        %s242 = scalar_lea.sflag [#allocation9], %s241
        %s243 = sand.u32 %s80, 1
        %s244 = smul.addr %s243, 8
        %s245 = scalar_lea.vmem [#allocation8], %s244
        // Predicated region
        $region37: #{tpu_custom_call.1} parent=31 // pred_check
          %p246 = pneg %p93
        $region38: #{tpu_custom_call.1} parent=31 // pred_check_branch
          %248 = sbr.rel (%p246) target = $region40
        $region39: #{tpu_custom_call.1} parent=31 // pred_region
          %249 = dma.done %s242, 128
        $region40: #{tpu_custom_call.1} parent=31 // pred_fallthru
          _
        %s250 = sand.u32 %s23, 1
        %s251 = scalar_lea.sflag [#allocation9], %s250
        %s252 = sand.u32 %s108, 1
        %s253 = smul.addr %s252, 8
        %s254 = scalar_lea.vmem [#allocation10], %s253
        // Predicated region
        $region41: #{tpu_custom_call.1} parent=31 // pred_check
          %p255 = pneg %p121
        $region42: #{tpu_custom_call.1} parent=31 // pred_check_branch
          %257 = sbr.rel (%p255) target = $region44
        $region43: #{tpu_custom_call.1} parent=31 // pred_region
          %258 = dma.done %s251, 128
        $region44: #{tpu_custom_call.1} parent=31 // pred_fallthru
          _
        %s259 = sand.u32 %s52, 1
        %s260 = scalar_lea.sflag [#allocation6], %s259
        %s261 = sand.u32 %s52, 1
        %s262 = smul.addr %s261, 8
        %s263 = scalar_lea.vmem [#allocation5], %s262
        %p264 = pneg %p65
        %p265 = pneg %p62
        %s266 = sand.u32 %s23, 1
        %s267 = scalar_lea.sflag [#allocation9], %s266
        %s268 = sand.u32 %s80, 1
        %s269 = smul.addr %s268, 8
        %s270 = scalar_lea.vmem [#allocation8], %s269
        %p271 = pneg %p93
        %p272 = pneg %p90
        %s273 = sand.u32 %s23, 1
        %s274 = scalar_lea.sflag [#allocation9], %s273
        %s275 = sand.u32 %s108, 1
        %s276 = smul.addr %s275, 8
        %s277 = scalar_lea.vmem [#allocation10], %s276
        %p278 = pneg %p121
        %p279 = pneg %p118
        %p280 = pneg %p149
        %p281 = pneg %p146
        %s282 = sand.u32 %s136, 1
        %s283 = scalar_lea.sflag [#allocation7], %s282
        %s284 = sand.u32 %s136, 1
        %s285 = smul.addr %s284, 8
        %s286 = scalar_lea.vmem [#allocation11], %s285
        %p288 = scmp.eq.s32.totalorder %s30, 0
        // Predicated region
        $region45: #{tpu_custom_call.1} parent=31 // pred_check
          %p289 = pneg %p288
        $region46: #{tpu_custom_call.1} parent=31 // pred_check_branch
          %291 = sbr.rel (%p289) target = $region48
        $region47: #{tpu_custom_call.1} parent=31 // pred_region
          %vm292 = vcmask 7168
          %293 = vst.msk [vmem:[#allocation2] sm:$0xff] %vm292, -inf
          %294 = vst.msk [vmem:[#allocation3] sm:$0xff] %vm292, 0.0
          %vm295 = vcmask 261120
          %296 = vst.msk [vmem:[#allocation4] sm:$0xff] %vm295, 0.0
        $region48: #{tpu_custom_call.1} parent=31 // pred_fallthru
          _
        %v297 = vld [vmem:[%s236] sm:$0xff]
        %v298 = vmul.f32 %v297, 0.25503486
        %v299 = vpack.c.bf16 %v298, %v298
        %v300 = vld [vmem:[%s245] sm:$0xff]
        %v301 = vpack.c.bf16 %v300, %v300
        %vm302 = vcmask 261120
        %v304 = vsel %vm302, %v299, 0
        %v307 = vsel %vm302, %v301, 0
        %309 = vmatprep.subr.bf16.mxu0 0
        %310 = vmatpush1.bf16.xpose.msra.mxu0 0
        %311 = vmatprep.subr.bf16.mxu0 0
        %312 = vmatpush1.bf16.xpose.msra.mxu0 0
        %313 = vmatprep.subr.bf16.mxu0 0
        %314 = vmatpush1.bf16.xpose.msra.mxu0 0
        %315 = vmatprep.subr.bf16.mxu0 0
        %316 = vmatpush1.bf16.xpose.msra.mxu0 0
        %317 = vmatprep.subr.bf16.mxu0 0
        %318 = vmatpush1.bf16.xpose.msra.mxu0 0
        %319 = vmatprep.subr.bf16.mxu0 0
        %320 = vmatpush1.bf16.xpose.msra.mxu0 0
        %321 = vmatprep.subr.bf16.mxu0 0
        %322 = vmatpush1.bf16.xpose.msra.mxu0 0
        %323 = vmatprep.subr.bf16.mxu0 0
        %324 = vmatpush1.bf16.xpose.msra.mxu0 %v307
        %325 = vmatprep.subr.bf16.mxu0 0
        %326 = vmatpush2.bf16.xpose.msra.mxu0 0
        %327 = vmatprep.subr.bf16.mxu0 0
        %328 = vmatpush2.bf16.xpose.msra.mxu0 0
        %329 = vmatprep.subr.bf16.mxu0 0
        %330 = vmatpush2.bf16.xpose.msra.mxu0 0
        %331 = vmatprep.subr.bf16.mxu0 0
        %332 = vmatpush2.bf16.xpose.msra.mxu0 0
        %333 = vmatprep.subr.bf16.mxu0 0
        %334 = vmatpush2.bf16.xpose.msra.mxu0 0
        %335 = vmatprep.subr.bf16.mxu0 0
        %336 = vmatpush2.bf16.xpose.msra.mxu0 0
        %337 = vmatprep.subr.bf16.mxu0 0
        %338 = vmatpush2.bf16.xpose.msra.mxu0 0
        %339 = vmatprep.subr.bf16.mxu0 0
        %340 = vmatpush2.bf16.xpose.msra.mxu0 0
        %341 = vmatprep.mubr.bf16.mxu0 0
        %342 = vmatmul.mubr.bf16.gmra.mxu0 %v304
        %v343 = vpop.f32.mrf.mxu0
        %v344 = vadd.f32 0.0, %v343
        %v345 = vpop.f32.mrf.mxu0
        %v346 = vpop.f32.mrf.mxu0
        %v347 = vpop.f32.mrf.mxu0
        %348 = vdwg.mxu0
        %v349 = vld [vmem:[#allocation2] sm:$0xff]
        %vm350 = vcmask 64512
        %v351 = vsel %vm350, %v344, -inf
        %352 = vmax.xlane.f32.xlu0 %v351
        %v353 = vpop.xlane.xlu0 %352
        %v354 = vmax.f32 %v349, %v353
        %v355 = vsub.f32 %v349, %v354
        %v356 = vpow.pop %v355
        %358 = vset.pattern.permute.xlu0 0
        %359 = vperm.xlu0 %358, %v354
        %v360 = vpop.permute.xlu0 %359
        %v362 = vsub.f32 %v344, %v360
        %v363 = vpow.pop %v362
        %v364 = vld [vmem:[#allocation3] sm:$0xff]
        %v365 = vmul.f32 %v356, %v364
        %v366 = vsel %vm350, %v363, 0.0
        %367 = vadd.xlane.f32.xlu0 %v366
        %v368 = vpop.xlane.xlu0 %367
        %v369 = vadd.f32 %v365, %v368
        %vm370 = vcmask 7168
        %371 = vst.msk [vmem:[#allocation3] sm:$0xff] %vm370, %v369
        %v372 = vld [vmem:[#allocation4] sm:$0xff]
        %374 = vset.pattern.permute.xlu0 0
        %375 = vperm.xlu0 %374, %v356
        %v376 = vpop.permute.xlu0 %375
        %v378 = vmul.f32 %v376, %v372
        %v379 = vpack.c.bf16 %v363, %v363
        %v380 = vld [vmem:[%s254] sm:$0xff]
        %v381 = vpack.c.bf16 %v380, %v380
        %v383 = vsel %vm350, %v379, 0
        %vm385 = vcmask 1043456
        %v387 = vsel %vm385, %v381, 0
        %389 = vmatprep.subr.bf16.mxu0 0
        %390 = vmatpush1.bf16.msra.mxu0 0
        %391 = vmatprep.subr.bf16.mxu0 0
        %392 = vmatpush1.bf16.msra.mxu0 0
        %393 = vmatprep.subr.bf16.mxu0 0
        %394 = vmatpush1.bf16.msra.mxu0 0
        %395 = vmatprep.subr.bf16.mxu0 0
        %396 = vmatpush1.bf16.msra.mxu0 0
        %397 = vmatprep.subr.bf16.mxu0 0
        %398 = vmatpush1.bf16.msra.mxu0 0
        %399 = vmatprep.subr.bf16.mxu0 0
        %400 = vmatpush1.bf16.msra.mxu0 0
        %401 = vmatprep.subr.bf16.mxu0 0
        %402 = vmatpush1.bf16.msra.mxu0 0
        %403 = vmatprep.subr.bf16.mxu0 0
        %404 = vmatpush1.bf16.msra.mxu0 %v387
        %405 = vmatprep.subr.bf16.mxu0 0
        %406 = vmatpush2.bf16.msra.mxu0 0
        %407 = vmatprep.subr.bf16.mxu0 0
        %408 = vmatpush2.bf16.msra.mxu0 0
        %409 = vmatprep.subr.bf16.mxu0 0
        %410 = vmatpush2.bf16.msra.mxu0 0
        %411 = vmatprep.subr.bf16.mxu0 0
        %412 = vmatpush2.bf16.msra.mxu0 0
        %413 = vmatprep.subr.bf16.mxu0 0
        %414 = vmatpush2.bf16.msra.mxu0 0
        %415 = vmatprep.subr.bf16.mxu0 0
        %416 = vmatpush2.bf16.msra.mxu0 0
        %417 = vmatprep.subr.bf16.mxu0 0
        %418 = vmatpush2.bf16.msra.mxu0 0
        %419 = vmatprep.subr.bf16.mxu0 0
        %420 = vmatpush2.bf16.msra.mxu0 0
        %421 = vmatprep.mubr.bf16.mxu0 0
        %422 = vmatmul.mubr.bf16.gmra.mxu0 %v383
        %v423 = vpop.f32.mrf.mxu0
        %v424 = vadd.f32 0.0, %v423
        %v425 = vpop.f32.mrf.mxu0
        %v426 = vpop.f32.mrf.mxu0
        %v427 = vpop.f32.mrf.mxu0
        %428 = vdwg.mxu0
        %v429 = vadd.f32 %v378, %v424
        %430 = vst.msk [vmem:[#allocation4] sm:$0xff] %vm302, %v429
        %431 = vst.msk [vmem:[#allocation2] sm:$0xff] %vm370, %v354
        // Predicated region
        $region49: #{tpu_custom_call.1} parent=31 // pred_check
          %p432 = pneg %p288
        $region50: #{tpu_custom_call.1} parent=31 // pred_check_branch
          %434 = sbr.rel (%p432) target = $region52
        $region51: #{tpu_custom_call.1} parent=31 // pred_region
          %v435 = vld [vmem:[#allocation3] sm:$0xff]
          %v436 = vrcp.pop %v435
          %v437 = vld [vmem:[#allocation4] sm:$0xff]
          %439 = vset.pattern.permute.xlu0 0
          %440 = vperm.xlu0 %439, %v436
          %v441 = vpop.permute.xlu0 %440
          %v443 = vmul.f32 %v437, %v441
          %444 = vst.msk [vmem:[%s286] sm:$0xff] %vm302, %v443
        $region52: #{tpu_custom_call.1} parent=31 // pred_fallthru
          _
        %s445 = sand.u32 %s136, 1
        %s446 = scalar_lea.sflag [#allocation7], %s445
        %s447 = sand.u32 %s136, 1
        %s448 = smul.addr %s447, 8
        %s449 = scalar_lea.vmem [#allocation11], %s448
        // Predicated region
        $region53: #{tpu_custom_call.1} parent=31 // pred_check
          %p450 = pneg %p146
        $region54: #{tpu_custom_call.1} parent=31 // pred_check_branch
          %452 = sbr.rel (%p450) target = $region56
        $region55: #{tpu_custom_call.1} parent=31 // pred_region
          %s454 = ssub.s32 128, 128
          %455 = vsyncadd %s446, %s454
          %s456 = sadd.s32 %s29, %s28
          %s457 = smul.addr %s456, 128
          %s458 = scalar_lea.hbm %s3, %s457
          %s460 = sshll.u32 %s449, 4
          %s461 = int_to_ptr.vmem [resolvable:$true] %s460
          %463 = dma.vmem_to_hbm [thread:$0]  %s461, 128, %s458, %s446
        $region56: #{tpu_custom_call.1} parent=31 // pred_fallthru
          _
      $region32: #{tpu_custom_call.1} parent=5 // pred_fallthru
        _
      %p464 = scmp.le.s32.totalorder 2, %s18
      // Predicated region
      $region57: #{tpu_custom_call.1} parent=5 // pred_check
        %p465 = pneg %p464
      $region58: #{tpu_custom_call.1} parent=5 // pred_check_branch
        %467 = sbr.rel (%p465) target = $region60
      $region59: #{tpu_custom_call.1} parent=5 // pred_region
        %s468 = ssub.s32 %s18, 2
        // Predicated region
        $region61: #{tpu_custom_call.1} parent=59 // pred_check
          %p469 = pneg %p152
        $region62: #{tpu_custom_call.1} parent=59 // pred_check_branch
          %471 = sbr.rel (%p469) target = $region64
        $region63: #{tpu_custom_call.1} parent=59 // pred_region
          %s472 = sand.u32 %s137, 1
          %s473 = scalar_lea.sflag [#allocation7], %s472
          %s474 = sand.u32 %s137, 1
          %s475 = smul.addr %s474, 8
          %s476 = scalar_lea.vmem [#allocation11], %s475
          %477 = dma.done %s473, 128
        $region64: #{tpu_custom_call.1} parent=59 // pred_fallthru
          _
      $region60: #{tpu_custom_call.1} parent=5 // pred_fallthru
        _
    $region6: #{tpu_custom_call.1} parent=1 // loop_footer
      %s22 = sadd.s32 1, %s18
    $region7: #{tpu_custom_call.1} parent=1 // loop_footer_branch
      %17 = sbr.rel target = $region3
    $region8: #{tpu_custom_call.1} parent=1 // loop_exit
      _
    %478 = vsyncpa [#allocation6], 1
    %s479 = scalar_lea.sflag [#allocation6], 1
    %480 = vsyncpa %s479, 1
    %481 = vsyncpa [#allocation9], 1
    %s482 = scalar_lea.sflag [#allocation9], 1
    %483 = vsyncpa %s482, 1
    %484 = vsyncpa [#allocation7], 1
    %s485 = scalar_lea.sflag [#allocation7], 1
    %486 = vsyncpa %s485, 1

</llo_original>
